<compile_context>
chip_gen: v7x
topology: tpu7x:2x2x1
jax: 0.10.0
libtpu: 0.0.40
codegen_flags: <defaults>
</compile_context>

<pallas_src>
import math
import functools

import jax
import jax.numpy as jnp
from jax import lax
from jax.experimental import pallas as pl
from jax.experimental.pallas import tpu as pltpu


def _round_up(x, m):
    return ((x + m - 1) // m) * m


def _tile_bytes(rows, cols, itemsize):
    """Bytes a (rows, cols) block of the given dtype occupies in VMEM,
    including (sublane, lane) tile padding."""
    sub = 8 * max(1, 4 // itemsize)          # 8 for f32, 16 for bf16, 32 for int8
    return _round_up(rows, sub) * _round_up(cols, 128) * itemsize


def _vmem_estimate(tm, tn, *, in_f, r, x_it, a_it, b_it, o_it, bias_it):
    total = 0
    total += 2 * _tile_bytes(tm, in_f, x_it)   # x row tile (double-buffered)
    total += 2 * _tile_bytes(r, in_f, a_it)    # scaled lora_A (grid-invariant, 2 bufs)
    total += 2 * _tile_bytes(r, tn, b_it)      # lora_B.T out-feature tile
    total += 2 * _tile_bytes(tm, tn, o_it)     # output tile
    if bias_it:
        total += 2 * _tile_bytes(1, tn, bias_it)
    return total


def _make_kernel(has_bias):
    def compute(x_ref, a_ref, bt_ref, o_ref, bias_ref=None):
        # xa = x @ (scaling * A).T   -- [tm, r], f32 accumulate on the MXU.
        xa = lax.dot_general(
            x_ref[...], a_ref[...],
            dimension_numbers=(((1,), (1,)), ((), ())),
            preferred_element_type=jnp.float32,
        )
        # out = xa @ B.T  ==  [tm, r] @ [r, tn]  (plain MXU feed, no transpose).
        out = lax.dot_general(
            xa.astype(bt_ref.dtype), bt_ref[...],
            dimension_numbers=(((1,), (0,)), ((), ())),
            preferred_element_type=jnp.float32,
        )
        if bias_ref is not None:
            out = out + bias_ref[...].astype(jnp.float32)
        o_ref[...] = out.astype(o_ref.dtype)

    if has_bias:
        def kernel(x_ref, a_ref, bt_ref, bias_ref, o_ref):
            compute(x_ref, a_ref, bt_ref, o_ref, bias_ref=bias_ref)
    else:
        def kernel(x_ref, a_ref, bt_ref, o_ref):
            compute(x_ref, a_ref, bt_ref, o_ref)
    return kernel


def lora_linear_forward(x, lora_A, lora_B, scaling, bias=None, *,
                        tm_max=512, tn_max=2048, vmem_budget=None):
    """Pallas implementation of LoRALinear.forward (eval mode).

    x:       (batch, in_features)
    lora_A:  (r, in_features)
    lora_B:  (out_features, r)
    bias:    optional (out_features,)
    """
    batch, in_f = x.shape
    r, in_f2 = lora_A.shape
    out_f, r2 = lora_B.shape
    assert in_f == in_f2 and r == r2

    has_bias = bias is not None
    out_dtype = x.dtype

    # ---- VMEM budget from the actual chip (v7x: ~48 MiB, v5e/v6e: ~96 MiB). ----
    if vmem_budget is None:
        try:
            phys = int(pltpu.get_tpu_info().vmem_capacity_bytes)
        except Exception:
            phys = 64 << 20                       # conservative (v7x-sized) fallback
        vmem_budget = min((phys * 3) // 4, 100 << 20)

    est = functools.partial(
        _vmem_estimate, in_f=in_f, r=r,
        x_it=x.dtype.itemsize, a_it=lora_A.dtype.itemsize,
        b_it=lora_B.dtype.itemsize, o_it=jnp.dtype(out_dtype).itemsize,
        bias_it=(jnp.dtype(bias.dtype).itemsize if has_bias else 0))

    # ---- Tile caps: 8/128 aligned, shrunk to the VMEM budget (keep tm large). ----
    tm = min(tm_max, _round_up(batch, 8))
    tn = min(tn_max, _round_up(out_f, 128))
    while est(tm, tn) > vmem_budget and tn > 512:
        tn = max(512, _round_up(tn // 2, 128))
    # TODO(synk): K-axis tiling instead of shrinking tm for very large in_features.
    while est(tm, tn) > vmem_budget and tm > 128:
        tm = max(128, _round_up(tm // 2, 8))
    while est(tm, tn) > vmem_budget and tn > 128:
        tn = max(128, _round_up(tn // 2, 128))
    while est(tm, tn) > vmem_budget and tm > 8:
        tm = max(8, _round_up(tm // 2, 8))

    # ---- Re-derive tiles from the tile count to minimize padding waste. ----
    n_i = pl.cdiv(batch, tm)
    tm = _round_up(pl.cdiv(batch, n_i), 8)
    n_j = pl.cdiv(out_f, tn)
    tn = _round_up(pl.cdiv(out_f, n_j), 128)
    padded_batch = n_i * tm
    padded_out = n_j * tn

    # ---- Wrapper-side preprocessing: pad, fold scaling into A, transpose B. ----
    if padded_batch != batch:
        x = jnp.pad(x, ((0, padded_batch - batch), (0, 0)))
    a_scaled = lora_A * jnp.asarray(scaling, dtype=lora_A.dtype)
    b_t = lora_B.T                                  # [r, out_features]: lane-dense tiles
    if padded_out != out_f:
        b_t = jnp.pad(b_t, ((0, 0), (0, padded_out - out_f)))
        if has_bias:
            bias = jnp.pad(bias, (0, padded_out - out_f))

    kernel = _make_kernel(has_bias)

    in_specs = [
        pl.BlockSpec((tm, in_f), lambda i, j: (i, 0)),   # x row tile
        pl.BlockSpec((r, in_f), lambda i, j: (0, 0)),    # scaled lora_A (grid-invariant)
        pl.BlockSpec((r, tn), lambda i, j: (0, j)),      # lora_B.T out-feature tile
    ]
    args = [x, a_scaled, b_t]
    if has_bias:
        in_specs.append(pl.BlockSpec((1, tn), lambda i, j: (0, j)))
        args.append(bias.reshape(1, padded_out))

    vmem_limit = int(min(vmem_budget + (8 << 20),
                         max(est(tm, tn) + (8 << 20), 32 << 20)))

    out = pl.pallas_call(
        kernel,
        out_shape=jax.ShapeDtypeStruct((padded_batch, padded_out), out_dtype),
        grid_spec=pltpu.PrefetchScalarGridSpec(
            num_scalar_prefetch=0,
            grid=(n_i, n_j),
            in_specs=in_specs,
            out_specs=pl.BlockSpec((tm, tn), lambda i, j: (i, j)),
        ),
        compiler_params=pltpu.CompilerParams(
            # No carried state: both axes are independent -> megacore can shard
            # over either batch or out-feature tiles (v7x).
            dimension_semantics=("parallel", "parallel"),
            vmem_limit_bytes=vmem_limit,
        ),
    )(*args)

    if padded_batch != batch or padded_out != out_f:
        out = out[:batch, :out_f]
    return out


if __name__ == "__main__":
    # Module config (small shapes; LoRALinear defaults r=8, alpha=16).
    in_features = 32
    out_features = 32
    r = 8
    alpha = 16.0
    scaling = alpha / r
    batch = 16

    key = jax.random.PRNGKey(0)
    kx, ka, kb, kbias, kx2 = jax.random.split(key, 5)

    # reset_parameters(): lora_A ~ kaiming_uniform(a=sqrt(5)); lora_B is zeros in
    # the reference (which makes the output identically zero), so use a small
    # random lora_B here to exercise the full compute path.
    bound = 1.0 / math.sqrt(in_features)
    lora_A = jax.random.uniform(ka, (r, in_features), jnp.float32, -bound, bound)
    lora_B = jax.random.normal(kb, (out_features, r), jnp.float32) * 0.02
    x = jax.random.normal(kx, (batch, in_features), jnp.float32)

    # No-bias path (module default).
    y = lora_linear_forward(x, lora_A, lora_B, scaling)
    y = jax.block_until_ready(y)
    y_ref = (x @ lora_A.T @ lora_B.T) * scaling
    assert y.shape == (batch, out_features)
    assert jnp.allclose(y, y_ref, atol=1e-5, rtol=1e-5), "mismatch vs reference (no bias)"

    # Bias path + ragged batch (exercises wrapper padding and lane-dense out tiles).
    batch2 = 13
    x2 = jax.random.normal(kx2, (batch2, in_features), jnp.float32)
    bias = jax.random.normal(kbias, (out_features,), jnp.float32) * 0.1
    y2 = lora_linear_forward(x2, lora_A, lora_B, scaling, bias=bias)
    y2 = jax.block_until_ready(y2)
    y2_ref = (x2 @ lora_A.T @ lora_B.T) * scaling + bias
    assert y2.shape == (batch2, out_features)
    assert jnp.allclose(y2, y2_ref, atol=1e-5, rtol=1e-5), "mismatch vs reference (bias)"

    print("KERNEL_OK")
</pallas_src>

<mosaic_0001>
module attributes {stable_mosaic.version = 11 : i64} {
  func.func @kernel(%arg0: i32, %arg1: i32, %arg2: memref<16x32xf32, #tpu.memory_space<vmem>>, %arg3: memref<8x32xf32, #tpu.memory_space<vmem>>, %arg4: memref<8x128xf32, #tpu.memory_space<vmem>>, %arg5: memref<16x128xf32, #tpu.memory_space<vmem>>) attributes {dimension_semantics = [#tpu.dimension_semantics<parallel>, #tpu.dimension_semantics<parallel>], iteration_bounds = array<i64: 1, 1>, scalar_prefetch = 0 : i64, scratch_operands = 0 : i64, tpu.core_type = #tpu.core_type<tc>, window_params = [{transform_indices = @transform_0, window_bounds = array<i64: 16, 32>}, {pipeline_mode = #tpu.pipeline_mode<synchronous>, transform_indices = @transform_1, window_bounds = array<i64: 8, 32>}, {transform_indices = @transform_2, window_bounds = array<i64: 8, 128>}, {transform_indices = @transform_3, window_bounds = array<i64: 16, 128>}]} {
    %c0 = arith.constant 0 : index
    %c0_0 = arith.constant 0 : index
    %0 = vector.load %arg2[%c0, %c0_0] : memref<16x32xf32, #tpu.memory_space<vmem>>, vector<16x32xf32>
    %c0_1 = arith.constant 0 : index
    %c0_2 = arith.constant 0 : index
    %1 = vector.load %arg3[%c0_1, %c0_2] : memref<8x32xf32, #tpu.memory_space<vmem>>, vector<8x32xf32>
    %cst = arith.constant dense<0.000000e+00> : vector<16x8xf32>
    %2 = tpu.matmul %0, %1, %cst {dimension_numbers = #tpu.dot_dimension_numbers<[1], [1], [0], [0], [0, 0, 1, 0], [], []>} : vector<16x32xf32>, vector<8x32xf32>, vector<16x8xf32> -> vector<16x8xf32>
    %c0_3 = arith.constant 0 : index
    %c0_4 = arith.constant 0 : index
    %3 = vector.load %arg4[%c0_3, %c0_4] : memref<8x128xf32, #tpu.memory_space<vmem>>, vector<8x128xf32>
    %cst_5 = arith.constant dense<0.000000e+00> : vector<16x128xf32>
    %4 = tpu.matmul %2, %3, %cst_5 {dimension_numbers = #tpu.dot_dimension_numbers<[1], [0], [0], [1], [0, 0, 1, 1], [], []>} : vector<16x8xf32>, vector<8x128xf32>, vector<16x128xf32> -> vector<16x128xf32>
    %c0_6 = arith.constant 0 : index
    %c0_7 = arith.constant 0 : index
    %5 = vector.load %arg5[%c0_6, %c0_7] : memref<16x128xf32, #tpu.memory_space<vmem>>, vector<16x128xf32>
    tpu.vector_store %arg5[%c0_6, %c0_7], %4 {strides = array<i32>} : memref<16x128xf32, #tpu.memory_space<vmem>>, vector<16x128xf32>,
    return
  }
  func.func @transform_0(%arg0: i32, %arg1: i32) -> (i32, i32) {
    %c0_i32 = arith.constant 0 : i32
    %c0_i32_0 = arith.constant 0 : i32
    return %arg0, %c0_i32 : i32, i32
  }
  func.func @transform_1(%arg0: i32, %arg1: i32) -> (i32, i32) {
    %c0_i32 = arith.constant 0 : i32
    %c0_i32_0 = arith.constant 0 : i32
    %c0_i32_1 = arith.constant 0 : i32
    return %c0_i32, %c0_i32_0 : i32, i32
  }
  func.func @transform_2(%arg0: i32, %arg1: i32) -> (i32, i32) {
    %c0_i32 = arith.constant 0 : i32
    %c0_i32_0 = arith.constant 0 : i32
    return %c0_i32, %arg1 : i32, i32
  }
  func.func @transform_3(%arg0: i32, %arg1: i32) -> (i32, i32) {
    %c0_i32 = arith.constant 0 : i32
    return %arg0, %arg1 : i32, i32
  }
}

</mosaic_0001>

<llo_original>
// kernel: tpu_custom_call.1
$region0: #{tpu_custom_call.1}
  #allocation0 [shape = 'u32[]', space=smem, size = 0x4, offset = 0x4, fixed_abs, tag = 'smem constant byte address 0x4 - core index']
  #allocation1 [shape = 'u32[144,128]{1,0:T(1,128)}', space=vmem, size = 0x12000, scoped, tag = 'internal scratch']
  %s0 = inlined_call_operand.hbm [shape: f32[16,32], index: 0, kind: input, shape index: {}]
  %s1 = inlined_call_operand.hbm [shape: f32[8,32], index: 1, kind: input, shape index: {}]
  %s2 = inlined_call_operand.hbm [shape: f32[8,128], index: 2, kind: input, shape index: {}]
  %s3 = inlined_call_operand.hbm [shape: f32[16,128], index: 3, kind: output, shape index: {}]
  %s4 = sld [smem:[#allocation0]]
  $region34: #{tpu_custom_call.1} parent=0
    _
  %s6 = ssub.s32 1, %s4
  %s7 = scalar_select 0, %s6, %s4
  $region1: #{tpu_custom_call.1} parent=0
    #allocation2 [shape = 'u8[8192]{0}', space=vmem, size = 0x2000, scoped, tag = 'input window, operand 0, single buffered']
    #allocation3 [shape = 's32[1]{0}', space=sflag, size = 0x4, scoped, tag = 'scoped memory for tpu_custom_call.1']
    #allocation4 [shape = 's32[1]{0}', space=sflag, size = 0x4, scoped, tag = 'scoped memory for tpu_custom_call.1']
    #allocation5 [shape = 'u8[4096]{0}', space=vmem, size = 0x1000, scoped, tag = 'input window, operand 1, single buffered']
    #allocation6 [shape = 's32[1]{0}', space=sflag, size = 0x4, scoped, tag = 'scoped memory for tpu_custom_call.1']
    #allocation7 [shape = 'u8[4096]{0}', space=vmem, size = 0x1000, scoped, tag = 'input window, operand 2, single buffered']
    #allocation8 [shape = 'u8[8192]{0}', space=vmem, size = 0x2000, scoped, tag = 'output window, operand 0, single buffered']
    %8 = vsyncpa [#allocation3], 0
    %9 = vsyncpa [#allocation6], 0
    %10 = vsyncpa [#allocation4], 0
    // Predicated region
    $region2: #{tpu_custom_call.1} parent=1 // pred_check
      _
    $region3: #{tpu_custom_call.1} parent=1 // pred_check_branch
      %12 = sbr.rel (0) target = $region5
    $region4: #{tpu_custom_call.1} parent=1 // pred_region
      %s14 = ssub.s32 256, 256
      %15 = vsyncadd [#allocation3], %s14
      %s16 = sshll.u32 [#allocation2], 4
      %s17 = int_to_ptr.vmem [resolvable:$true] %s16
      %22 = dma.hbm_to_vmem [thread:$0]  %s0, 256, %s17, [#allocation3], 128, 128, 8
    $region5: #{tpu_custom_call.1} parent=1 // pred_fallthru
      _
    // Predicated region
    $region6: #{tpu_custom_call.1} parent=1 // pred_check
      _
    $region7: #{tpu_custom_call.1} parent=1 // pred_check_branch
      %24 = sbr.rel (0) target = $region9
    $region8: #{tpu_custom_call.1} parent=1 // pred_region
      %s26 = ssub.s32 128, 128
      %27 = vsyncadd [#allocation6], %s26
      %s29 = sshll.u32 [#allocation5], 4
      %s30 = int_to_ptr.vmem [resolvable:$true] %s29
      %32 = dma.hbm_to_vmem [thread:$0]  %s1, 128, %s30, [#allocation6]
    $region9: #{tpu_custom_call.1} parent=1 // pred_fallthru
      _
    // Predicated region
    $region10: #{tpu_custom_call.1} parent=1 // pred_check
      _
    $region11: #{tpu_custom_call.1} parent=1 // pred_check_branch
      %34 = sbr.rel (0) target = $region13
    $region12: #{tpu_custom_call.1} parent=1 // pred_region
      %s36 = ssub.s32 128, 128
      %37 = vsyncadd [#allocation6], %s36
      %s39 = sshll.u32 [#allocation7], 4
      %s40 = int_to_ptr.vmem [resolvable:$true] %s39
      %42 = dma.hbm_to_vmem [thread:$0]  %s2, 128, %s40, [#allocation6]
    $region13: #{tpu_custom_call.1} parent=1 // pred_fallthru
      _
    // Predicated region
    $region14: #{tpu_custom_call.1} parent=1 // pred_check
      _
    $region15: #{tpu_custom_call.1} parent=1 // pred_check_branch
      %44 = sbr.rel (0) target = $region17
    $region16: #{tpu_custom_call.1} parent=1 // pred_region
      %45 = dma.done [#allocation3], 256
    $region17: #{tpu_custom_call.1} parent=1 // pred_fallthru
      _
    // Predicated region
    $region18: #{tpu_custom_call.1} parent=1 // pred_check
      _
    $region19: #{tpu_custom_call.1} parent=1 // pred_check_branch
      %47 = sbr.rel (0) target = $region21
    $region20: #{tpu_custom_call.1} parent=1 // pred_region
      %48 = dma.done [#allocation6], 128
    $region21: #{tpu_custom_call.1} parent=1 // pred_fallthru
      _
    // Predicated region
    $region22: #{tpu_custom_call.1} parent=1 // pred_check
      _
    $region23: #{tpu_custom_call.1} parent=1 // pred_check_branch
      %50 = sbr.rel (0) target = $region25
    $region24: #{tpu_custom_call.1} parent=1 // pred_region
      %51 = dma.done [#allocation6], 128
    $region25: #{tpu_custom_call.1} parent=1 // pred_fallthru
      _
    %v52 = vld [vmem:[#allocation2] sm:$0xff]
    %v53 = vld [vmem:[#allocation2 + $0x8] sm:$0xff]
    %v54 = vld [vmem:[#allocation5] sm:$0xff]
    %vm55 = vcmask 261120
    %v57 = vsel %vm55, %v52, 0
    %v60 = vsel %vm55, %v53, 0
    %v63 = vsel %vm55, %v54, 0
    %65 = vmatprep.subr.mxu0 0.0
    %66 = vmatpush1.xpose.msra.mxu0 %v63
    %67 = vmatprep.subr.mxu0 0.0
    %68 = vmatpush1.xpose.msra.mxu0 0.0
    %69 = vmatprep.subr.mxu0 0.0
    %70 = vmatpush1.xpose.msra.mxu0 0.0
    %71 = vmatprep.subr.mxu0 0.0
    %72 = vmatpush1.xpose.msra.mxu0 0.0
    %73 = vmatprep.subr.mxu0 0.0
    %74 = vmatpush1.xpose.msra.mxu0 0.0
    %75 = vmatprep.subr.mxu0 0.0
    %76 = vmatpush1.xpose.msra.mxu0 0.0
    %77 = vmatprep.subr.mxu0 0.0
    %78 = vmatpush1.xpose.msra.mxu0 0.0
    %79 = vmatprep.subr.mxu0 0.0
    %80 = vmatpush1.xpose.msra.mxu0 0.0
    %81 = vmatprep.subr.mxu0 0.0
    %82 = vmatpush1.xpose.msra.mxu0 0.0
    %83 = vmatprep.subr.mxu0 0.0
    %84 = vmatpush1.xpose.msra.mxu0 0.0
    %85 = vmatprep.subr.mxu0 0.0
    %86 = vmatpush1.xpose.msra.mxu0 0.0
    %87 = vmatprep.subr.mxu0 0.0
    %88 = vmatpush1.xpose.msra.mxu0 0.0
    %89 = vmatprep.subr.mxu0 0.0
    %90 = vmatpush1.xpose.msra.mxu0 0.0
    %91 = vmatprep.subr.mxu0 0.0
    %92 = vmatpush1.xpose.msra.mxu0 0.0
    %93 = vmatprep.subr.mxu0 0.0
    %94 = vmatpush1.xpose.msra.mxu0 0.0
    %95 = vmatprep.subr.mxu0 0.0
    %96 = vmatpush1.xpose.msra.mxu0 0.0
    %97 = vmatprep.subr.mxu0 0.0
    %98 = vmatpush1.xpose.msra.mxu0 0.0
    %99 = vmatprep.subr.mxu0 0.0
    %100 = vmatpush1.xpose.msra.mxu0 0.0
    %101 = vmatprep.subr.mxu0 0.0
    %102 = vmatpush1.xpose.msra.mxu0 0.0
    %103 = vmatprep.subr.mxu0 0.0
    %104 = vmatpush1.xpose.msra.mxu0 0.0
    %105 = vmatprep.subr.mxu0 0.0
    %106 = vmatpush1.xpose.msra.mxu0 0.0
    %107 = vmatprep.subr.mxu0 0.0
    %108 = vmatpush1.xpose.msra.mxu0 0.0
    %109 = vmatprep.subr.mxu0 0.0
    %110 = vmatpush1.xpose.msra.mxu0 0.0
    %111 = vmatprep.subr.mxu0 0.0
    %112 = vmatpush1.xpose.msra.mxu0 0.0
    %113 = vmatprep.subr.mxu0 0.0
    %114 = vmatpush1.xpose.msra.mxu0 0.0
    %115 = vmatprep.subr.mxu0 0.0
    %116 = vmatpush1.xpose.msra.mxu0 0.0
    %117 = vmatprep.subr.mxu0 0.0
    %118 = vmatpush1.xpose.msra.mxu0 0.0
    %119 = vmatprep.subr.mxu0 0.0
    %120 = vmatpush1.xpose.msra.mxu0 0.0
    %121 = vmatprep.subr.mxu0 0.0
    %122 = vmatpush1.xpose.msra.mxu0 0.0
    %123 = vmatprep.subr.mxu0 0.0
    %124 = vmatpush1.xpose.msra.mxu0 0.0
    %125 = vmatprep.subr.mxu0 0.0
    %126 = vmatpush1.xpose.msra.mxu0 0.0
    %127 = vmatprep.subr.mxu0 0.0
    %128 = vmatpush1.xpose.msra.mxu0 0.0
    %129 = vmatprep.mubr.f32.mxu0 0.0
    %130 = vmatmul.mubr.f32.gmra.mrb[0].mxu0 %v57
    %v131 = vpop.f32.mrb[0].mxu0
    %v132 = vadd.f32 0.0, %v131
    %v133 = vpop.f32.mrb[0].mxu0
    %134 = vmatprep.mubr.f32.mxu0 0.0
    %135 = vmatmul.mubr.f32.gmra.mrb[0].mxu0 %v60
    %v136 = vpop.f32.mrb[0].mxu0
    %v137 = vadd.f32 0.0, %v136
    %v138 = vpop.f32.mrb[0].mxu0
    %139 = vdwg.mxu0
    %v140 = vld [vmem:[#allocation7] sm:$0xff]
    %vm141 = vcmask 64512
    %v143 = vsel %vm141, %v132, 0
    %v146 = vsel %vm141, %v137, 0
    %148 = vmatprep.subr.mxu0 0.0
    %149 = vmatpush1.msra.mxu0 %v140
    %150 = vmatprep.subr.mxu0 0.0
    %151 = vmatpush1.msra.mxu0 0.0
    %152 = vmatprep.subr.mxu0 0.0
    %153 = vmatpush1.msra.mxu0 0.0
    %154 = vmatprep.subr.mxu0 0.0
    %155 = vmatpush1.msra.mxu0 0.0
    %156 = vmatprep.subr.mxu0 0.0
    %157 = vmatpush1.msra.mxu0 0.0
    %158 = vmatprep.subr.mxu0 0.0
    %159 = vmatpush1.msra.mxu0 0.0
    %160 = vmatprep.subr.mxu0 0.0
    %161 = vmatpush1.msra.mxu0 0.0
    %162 = vmatprep.subr.mxu0 0.0
    %163 = vmatpush1.msra.mxu0 0.0
    %164 = vmatprep.subr.mxu0 0.0
    %165 = vmatpush1.msra.mxu0 0.0
    %166 = vmatprep.subr.mxu0 0.0
    %167 = vmatpush1.msra.mxu0 0.0
    %168 = vmatprep.subr.mxu0 0.0
    %169 = vmatpush1.msra.mxu0 0.0
    %170 = vmatprep.subr.mxu0 0.0
    %171 = vmatpush1.msra.mxu0 0.0
    %172 = vmatprep.subr.mxu0 0.0
    %173 = vmatpush1.msra.mxu0 0.0
    %174 = vmatprep.subr.mxu0 0.0
    %175 = vmatpush1.msra.mxu0 0.0
    %176 = vmatprep.subr.mxu0 0.0
    %177 = vmatpush1.msra.mxu0 0.0
    %178 = vmatprep.subr.mxu0 0.0
    %179 = vmatpush1.msra.mxu0 0.0
    %180 = vmatprep.subr.mxu0 0.0
    %181 = vmatpush1.msra.mxu0 0.0
    %182 = vmatprep.subr.mxu0 0.0
    %183 = vmatpush1.msra.mxu0 0.0
    %184 = vmatprep.subr.mxu0 0.0
    %185 = vmatpush1.msra.mxu0 0.0
    %186 = vmatprep.subr.mxu0 0.0
    %187 = vmatpush1.msra.mxu0 0.0
    %188 = vmatprep.subr.mxu0 0.0
    %189 = vmatpush1.msra.mxu0 0.0
    %190 = vmatprep.subr.mxu0 0.0
    %191 = vmatpush1.msra.mxu0 0.0
    %192 = vmatprep.subr.mxu0 0.0
    %193 = vmatpush1.msra.mxu0 0.0
    %194 = vmatprep.subr.mxu0 0.0
    %195 = vmatpush1.msra.mxu0 0.0
    %196 = vmatprep.subr.mxu0 0.0
    %197 = vmatpush1.msra.mxu0 0.0
    %198 = vmatprep.subr.mxu0 0.0
    %199 = vmatpush1.msra.mxu0 0.0
    %200 = vmatprep.subr.mxu0 0.0
    %201 = vmatpush1.msra.mxu0 0.0
    %202 = vmatprep.subr.mxu0 0.0
    %203 = vmatpush1.msra.mxu0 0.0
    %204 = vmatprep.subr.mxu0 0.0
    %205 = vmatpush1.msra.mxu0 0.0
    %206 = vmatprep.subr.mxu0 0.0
    %207 = vmatpush1.msra.mxu0 0.0
    %208 = vmatprep.subr.mxu0 0.0
    %209 = vmatpush1.msra.mxu0 0.0
    %210 = vmatprep.subr.mxu0 0.0
    %211 = vmatpush1.msra.mxu0 0.0
    %212 = vmatprep.mubr.f32.mxu0 0.0
    %213 = vmatmul.mubr.f32.gmra.mrb[0].mxu0 %v143
    %v214 = vpop.f32.mrb[0].mxu0
    %v215 = vadd.f32 0.0, %v214
    %v216 = vpop.f32.mrb[0].mxu0
    %217 = vmatprep.mubr.f32.mxu0 0.0
    %218 = vmatmul.mubr.f32.gmra.mrb[0].mxu0 %v146
    %v219 = vpop.f32.mrb[0].mxu0
    %v220 = vadd.f32 0.0, %v219
    %v221 = vpop.f32.mrb[0].mxu0
    %222 = vdwg.mxu0
    %223 = vst [vmem:[#allocation8] sm:$0xff] %v215
    %224 = vst [vmem:[#allocation8 + $0x8] sm:$0xff] %v220
    // Predicated region
    $region26: #{tpu_custom_call.1} parent=1 // pred_check
      _
    $region27: #{tpu_custom_call.1} parent=1 // pred_check_branch
      %226 = sbr.rel (0) target = $region29
    $region28: #{tpu_custom_call.1} parent=1 // pred_region
      %s228 = ssub.s32 256, 256
      %229 = vsyncadd [#allocation4], %s228
      %s230 = sshll.u32 [#allocation8], 4
      %s231 = int_to_ptr.vmem [resolvable:$true] %s230
      %236 = dma.vmem_to_hbm [thread:$0]  %s231, 256, %s3, [#allocation4], 128, 128, 8
    $region29: #{tpu_custom_call.1} parent=1 // pred_fallthru
      _
    // Predicated region
    $region30: #{tpu_custom_call.1} parent=1 // pred_check
      _
    $region31: #{tpu_custom_call.1} parent=1 // pred_check_branch
      %238 = sbr.rel (0) target = $region33
    $region32: #{tpu_custom_call.1} parent=1 // pred_region
      %239 = dma.done [#allocation4], 256
    $region33: #{tpu_custom_call.1} parent=1 // pred_fallthru
      _
    %240 = vsyncpa [#allocation3], 1
    %241 = vsyncpa [#allocation6], 1
    %242 = vsyncpa [#allocation4], 1

</llo_original>
